<compile_context>
chip_gen: v7x
topology: tpu7x:2x2x1
jax: 0.10.0
libtpu: 0.0.40
codegen_flags: <defaults>
</compile_context>

<pallas_src>
import jax
import jax.numpy as jnp
import numpy as np
from jax.experimental import pallas as pl
from jax.experimental.pallas import tpu as pltpu

H = 3          # hidden size
IN = 1         # input size
G = 4 * H      # gate width (i, f, g, o)


def lstm_fc_kernel(x_ref, p_ref, y_ref):
    """Single-sequence LSTM recurrence + fused Linear, fully unrolled.

    x_ref : (T, 1)   input for the last batch element
    p_ref : (8, 4H)  packed params:
                     row 0      : W_ih (flattened, input_size=1)
                     row 1      : b_ih + b_hh
                     rows 2..4  : W_hh^T  (H, 4H)
                     row 5      : [fc_w (H), fc_b, 0...]
    y_ref : (T, 1)   output
    """
    T = x_ref.shape[0]

    # ---- load all params once (a single small VMEM tile) ---------------------
    p = p_ref[...]                                      # (8, 4H)
    w_ih_row = p[0:1, :]                                # (1, 4H)
    b_row = p[1:2, :]                                   # (1, 4H)
    w_hh_rows = [p[2 + k:3 + k, :] for k in range(H)]   # H x (1, 4H)
    fc_w_row = p[5:6, 0:H]                              # (1, H)
    fc_b = p[5:6, H:H + 1]                              # (1, 1)

    # ---- input projection for all timesteps (no serial dependence) ----------
    # input_size == 1  =>  x_t @ W_ih^T == x_t * W_ih
    xw_all = x_ref[...] * w_ih_row + b_row              # (T,1)*(1,4H)+(1,4H) -> (T,4H)

    # ---- recurrence: h/c stay register-resident, loop fully unrolled --------
    h = jnp.zeros((1, H), jnp.float32)
    c = jnp.zeros((1, H), jnp.float32)
    hs = []
    for t in range(T):
        gates = xw_all[t:t + 1, :]                      # (1, 4H)
        # h @ W_hh^T as a VPU broadcast-multiply-accumulate (MXU would add
        # drain latency on the serial chain for a 3x12 matmul):
        for k in range(H):
            gates = gates + h[:, k:k + 1] * w_hh_rows[k]
        # Two full-vreg EUP pushes instead of four tiny ones:
        sig = jax.nn.sigmoid(gates)                     # i, f, o live here
        th = jnp.tanh(gates)                            # g lives here
        i_g = sig[:, 0 * H:1 * H]
        f_g = sig[:, 1 * H:2 * H]
        g_g = th[:, 2 * H:3 * H]
        o_g = sig[:, 3 * H:4 * H]
        c = f_g * c + i_g * g_g
        h = o_g * jnp.tanh(c)
        hs.append(h)

    # ---- fused fc over the whole hidden trajectory (VPU mul + lane reduce) ---
    h_all = jnp.concatenate(hs, axis=0)                 # (T, H)
    y_ref[...] = jnp.sum(h_all * fc_w_row, axis=-1, keepdims=True) + fc_b


@jax.jit
def lstm_forward_pallas(x, params):
    w_ih, w_hh, b_ih, b_hh, fc_w, fc_b = params
    T, B, _ = x.shape

    # Only the last batch element feeds output[:, -1, :]  (batch elements are
    # independent in an LSTM), so slice it out before the kernel.
    x_last = x[:, B - 1, :].astype(jnp.float32)         # (T, 1)

    # Pack every weight/bias into one tiny f32 array -> a single input DMA.
    p = jnp.zeros((8, G), jnp.float32)
    p = p.at[0, :].set(w_ih[:, 0])                      # W_ih (4H,)
    p = p.at[1, :].set(b_ih + b_hh)                     # combined bias (4H,)
    p = p.at[2:2 + H, :].set(w_hh.T)                    # W_hh^T (H, 4H)
    p = p.at[5, :H].set(fc_w[0, :])                     # fc weight (H,)
    p = p.at[5, H].set(fc_b[0])                         # fc bias

    return pl.pallas_call(
        lstm_fc_kernel,
        out_shape=jax.ShapeDtypeStruct((T, 1), jnp.float32),
        in_specs=[pl.BlockSpec(memory_space=pltpu.MemorySpace.VMEM)] * 2,
        out_specs=pl.BlockSpec(memory_space=pltpu.MemorySpace.VMEM),
    )(x_last, p)


def lstm_forward_ref(x, params):
    """Pure-JAX reference, matching torch.nn.LSTM / Linear semantics exactly."""
    w_ih, w_hh, b_ih, b_hh, fc_w, fc_b = params
    T, B, _ = x.shape

    def step(carry, x_t):
        h, c = carry
        gates = x_t @ w_ih.T + h @ w_hh.T + b_ih + b_hh
        i, f, g, o = jnp.split(gates, 4, axis=-1)
        i, f, o = jax.nn.sigmoid(i), jax.nn.sigmoid(f), jax.nn.sigmoid(o)
        g = jnp.tanh(g)
        c = f * c + i * g
        h = o * jnp.tanh(c)
        return (h, c), h

    init = (jnp.zeros((B, H), jnp.float32), jnp.zeros((B, H), jnp.float32))
    _, output = jax.lax.scan(step, init, x)             # (T, B, H)
    return output[:, -1, :] @ fc_w.T + fc_b             # (T, 1)


def init_params(key):
    """Deterministic init mimicking PyTorch's U(-1/sqrt(H), 1/sqrt(H)) defaults."""
    k = 1.0 / np.sqrt(H)
    ks = jax.random.split(key, 6)
    w_ih = jax.random.uniform(ks[0], (4 * H, IN), jnp.float32, -k, k)
    w_hh = jax.random.uniform(ks[1], (4 * H, H), jnp.float32, -k, k)
    b_ih = jax.random.uniform(ks[2], (4 * H,), jnp.float32, -k, k)
    b_hh = jax.random.uniform(ks[3], (4 * H,), jnp.float32, -k, k)
    fc_w = jax.random.uniform(ks[4], (1, H), jnp.float32, -k, k)
    fc_b = jax.random.uniform(ks[5], (1,), jnp.float32, -k, k)
    return (w_ih, w_hh, b_ih, b_hh, fc_w, fc_b)


if __name__ == "__main__":
    key = jax.random.PRNGKey(0)
    k_param, k_x = jax.random.split(key)
    params = init_params(k_param)

    T, B = 8, 2                                          # seq_len=8, batch=2, input_size=1
    x = jax.random.normal(k_x, (T, B, IN), jnp.float32)

    y = lstm_forward_pallas(x, params)
    y = jax.block_until_ready(y)

    y_ref = jax.block_until_ready(lstm_forward_ref(x, params))
    assert y.shape == (T, 1), y.shape
    np.testing.assert_allclose(np.asarray(y), np.asarray(y_ref), rtol=1e-5, atol=1e-5)

    print("KERNEL_OK")
</pallas_src>

<mosaic_0001>
module attributes {stable_mosaic.version = 11 : i64} {
  func.func @lstm_fc_kernel(%arg0: memref<8x1xf32, #tpu.memory_space<vmem>>, %arg1: memref<8x12xf32, #tpu.memory_space<vmem>>, %arg2: memref<8x1xf32, #tpu.memory_space<vmem>>) attributes {dimension_semantics = [], scalar_prefetch = 0 : i64, scratch_operands = 0 : i64, tpu.core_type = #tpu.core_type<tc>} {
    %c0 = arith.constant 0 : index
    %c0_0 = arith.constant 0 : index
    %0 = vector.load %arg1[%c0, %c0_0] : memref<8x12xf32, #tpu.memory_space<vmem>>, vector<8x12xf32>
    %1 = vector.extract_strided_slice %0 {offsets = [0, 0], sizes = [1, 12], strides = [1, 1]} : vector<8x12xf32> to vector<1x12xf32>
    %2 = vector.extract_strided_slice %0 {offsets = [1, 0], sizes = [1, 12], strides = [1, 1]} : vector<8x12xf32> to vector<1x12xf32>
    %3 = vector.extract_strided_slice %0 {offsets = [2, 0], sizes = [1, 12], strides = [1, 1]} : vector<8x12xf32> to vector<1x12xf32>
    %4 = vector.extract_strided_slice %0 {offsets = [3, 0], sizes = [1, 12], strides = [1, 1]} : vector<8x12xf32> to vector<1x12xf32>
    %5 = vector.extract_strided_slice %0 {offsets = [4, 0], sizes = [1, 12], strides = [1, 1]} : vector<8x12xf32> to vector<1x12xf32>
    %6 = vector.extract_strided_slice %0 {offsets = [5, 0], sizes = [1, 3], strides = [1, 1]} : vector<8x12xf32> to vector<1x3xf32>
    %7 = vector.extract_strided_slice %0 {offsets = [5, 3], sizes = [1, 1], strides = [1, 1]} : vector<8x12xf32> to vector<1x1xf32>
    %c0_1 = arith.constant 0 : index
    %c0_2 = arith.constant 0 : index
    %8 = vector.load %arg0[%c0_1, %c0_2] : memref<8x1xf32, #tpu.memory_space<vmem>>, vector<8x1xf32>
    %9 = vector.broadcast %8 : vector<8x1xf32> to vector<8x12xf32>
    %10 = vector.broadcast %1 : vector<1x12xf32> to vector<8x12xf32>
    %11 = arith.mulf %9, %10 : vector<8x12xf32>
    %12 = vector.broadcast %2 : vector<1x12xf32> to vector<8x12xf32>
    %13 = arith.addf %11, %12 : vector<8x12xf32>
    %cst = arith.constant 0.000000e+00 : f32
    %14 = vector.broadcast %cst : f32 to vector<1x3xf32>
    %cst_3 = arith.constant 0.000000e+00 : f32
    %15 = vector.broadcast %cst_3 : f32 to vector<1x3xf32>
    %16 = vector.extract_strided_slice %13 {offsets = [0, 0], sizes = [1, 12], strides = [1, 1]} : vector<8x12xf32> to vector<1x12xf32>
    %17 = vector.extract_strided_slice %14 {offsets = [0, 0], sizes = [1, 1], strides = [1, 1]} : vector<1x3xf32> to vector<1x1xf32>
    %18 = vector.broadcast %17 : vector<1x1xf32> to vector<1x12xf32>
    %19 = arith.mulf %18, %3 : vector<1x12xf32>
    %20 = arith.addf %16, %19 : vector<1x12xf32>
    %21 = vector.extract_strided_slice %14 {offsets = [0, 1], sizes = [1, 1], strides = [1, 1]} : vector<1x3xf32> to vector<1x1xf32>
    %22 = vector.broadcast %21 : vector<1x1xf32> to vector<1x12xf32>
    %23 = arith.mulf %22, %4 : vector<1x12xf32>
    %24 = arith.addf %20, %23 : vector<1x12xf32>
    %25 = vector.extract_strided_slice %14 {offsets = [0, 2], sizes = [1, 1], strides = [1, 1]} : vector<1x3xf32> to vector<1x1xf32>
    %26 = vector.broadcast %25 : vector<1x1xf32> to vector<1x12xf32>
    %27 = arith.mulf %26, %5 : vector<1x12xf32>
    %28 = arith.addf %24, %27 : vector<1x12xf32>
    %29 = arith.negf %28 : vector<1x12xf32>
    %30 = math.exp %29 : vector<1x12xf32>
    %cst_4 = arith.constant 1.000000e+00 : f32
    %31 = vector.broadcast %cst_4 : f32 to vector<1x12xf32>
    %32 = arith.addf %31, %30 : vector<1x12xf32>
    %33 = arith.divf %31, %32 : vector<1x12xf32>
    %34 = math.tanh %28 : vector<1x12xf32>
    %35 = vector.extract_strided_slice %33 {offsets = [0, 0], sizes = [1, 3], strides = [1, 1]} : vector<1x12xf32> to vector<1x3xf32>
    %36 = vector.extract_strided_slice %33 {offsets = [0, 3], sizes = [1, 3], strides = [1, 1]} : vector<1x12xf32> to vector<1x3xf32>
    %37 = vector.extract_strided_slice %34 {offsets = [0, 6], sizes = [1, 3], strides = [1, 1]} : vector<1x12xf32> to vector<1x3xf32>
    %38 = vector.extract_strided_slice %33 {offsets = [0, 9], sizes = [1, 3], strides = [1, 1]} : vector<1x12xf32> to vector<1x3xf32>
    %39 = arith.mulf %36, %15 : vector<1x3xf32>
    %40 = arith.mulf %35, %37 : vector<1x3xf32>
    %41 = arith.addf %39, %40 : vector<1x3xf32>
    %42 = math.tanh %41 : vector<1x3xf32>
    %43 = arith.mulf %38, %42 : vector<1x3xf32>
    %44 = vector.extract_strided_slice %13 {offsets = [1, 0], sizes = [1, 12], strides = [1, 1]} : vector<8x12xf32> to vector<1x12xf32>
    %45 = vector.extract_strided_slice %43 {offsets = [0, 0], sizes = [1, 1], strides = [1, 1]} : vector<1x3xf32> to vector<1x1xf32>
    %46 = vector.broadcast %45 : vector<1x1xf32> to vector<1x12xf32>
    %47 = arith.mulf %46, %3 : vector<1x12xf32>
    %48 = arith.addf %44, %47 : vector<1x12xf32>
    %49 = vector.extract_strided_slice %43 {offsets = [0, 1], sizes = [1, 1], strides = [1, 1]} : vector<1x3xf32> to vector<1x1xf32>
    %50 = vector.broadcast %49 : vector<1x1xf32> to vector<1x12xf32>
    %51 = arith.mulf %50, %4 : vector<1x12xf32>
    %52 = arith.addf %48, %51 : vector<1x12xf32>
    %53 = vector.extract_strided_slice %43 {offsets = [0, 2], sizes = [1, 1], strides = [1, 1]} : vector<1x3xf32> to vector<1x1xf32>
    %54 = vector.broadcast %53 : vector<1x1xf32> to vector<1x12xf32>
    %55 = arith.mulf %54, %5 : vector<1x12xf32>
    %56 = arith.addf %52, %55 : vector<1x12xf32>
    %57 = arith.negf %56 : vector<1x12xf32>
    %58 = math.exp %57 : vector<1x12xf32>
    %cst_5 = arith.constant 1.000000e+00 : f32
    %59 = vector.broadcast %cst_5 : f32 to vector<1x12xf32>
    %60 = arith.addf %59, %58 : vector<1x12xf32>
    %61 = arith.divf %59, %60 : vector<1x12xf32>
    %62 = math.tanh %56 : vector<1x12xf32>
    %63 = vector.extract_strided_slice %61 {offsets = [0, 0], sizes = [1, 3], strides = [1, 1]} : vector<1x12xf32> to vector<1x3xf32>
    %64 = vector.extract_strided_slice %61 {offsets = [0, 3], sizes = [1, 3], strides = [1, 1]} : vector<1x12xf32> to vector<1x3xf32>
    %65 = vector.extract_strided_slice %62 {offsets = [0, 6], sizes = [1, 3], strides = [1, 1]} : vector<1x12xf32> to vector<1x3xf32>
    %66 = vector.extract_strided_slice %61 {offsets = [0, 9], sizes = [1, 3], strides = [1, 1]} : vector<1x12xf32> to vector<1x3xf32>
    %67 = arith.mulf %64, %41 : vector<1x3xf32>
    %68 = arith.mulf %63, %65 : vector<1x3xf32>
    %69 = arith.addf %67, %68 : vector<1x3xf32>
    %70 = math.tanh %69 : vector<1x3xf32>
    %71 = arith.mulf %66, %70 : vector<1x3xf32>
    %72 = vector.extract_strided_slice %13 {offsets = [2, 0], sizes = [1, 12], strides = [1, 1]} : vector<8x12xf32> to vector<1x12xf32>
    %73 = vector.extract_strided_slice %71 {offsets = [0, 0], sizes = [1, 1], strides = [1, 1]} : vector<1x3xf32> to vector<1x1xf32>
    %74 = vector.broadcast %73 : vector<1x1xf32> to vector<1x12xf32>
    %75 = arith.mulf %74, %3 : vector<1x12xf32>
    %76 = arith.addf %72, %75 : vector<1x12xf32>
    %77 = vector.extract_strided_slice %71 {offsets = [0, 1], sizes = [1, 1], strides = [1, 1]} : vector<1x3xf32> to vector<1x1xf32>
    %78 = vector.broadcast %77 : vector<1x1xf32> to vector<1x12xf32>
    %79 = arith.mulf %78, %4 : vector<1x12xf32>
    %80 = arith.addf %76, %79 : vector<1x12xf32>
    %81 = vector.extract_strided_slice %71 {offsets = [0, 2], sizes = [1, 1], strides = [1, 1]} : vector<1x3xf32> to vector<1x1xf32>
    %82 = vector.broadcast %81 : vector<1x1xf32> to vector<1x12xf32>
    %83 = arith.mulf %82, %5 : vector<1x12xf32>
    %84 = arith.addf %80, %83 : vector<1x12xf32>
    %85 = arith.negf %84 : vector<1x12xf32>
    %86 = math.exp %85 : vector<1x12xf32>
    %cst_6 = arith.constant 1.000000e+00 : f32
    %87 = vector.broadcast %cst_6 : f32 to vector<1x12xf32>
    %88 = arith.addf %87, %86 : vector<1x12xf32>
    %89 = arith.divf %87, %88 : vector<1x12xf32>
    %90 = math.tanh %84 : vector<1x12xf32>
    %91 = vector.extract_strided_slice %89 {offsets = [0, 0], sizes = [1, 3], strides = [1, 1]} : vector<1x12xf32> to vector<1x3xf32>
    %92 = vector.extract_strided_slice %89 {offsets = [0, 3], sizes = [1, 3], strides = [1, 1]} : vector<1x12xf32> to vector<1x3xf32>
    %93 = vector.extract_strided_slice %90 {offsets = [0, 6], sizes = [1, 3], strides = [1, 1]} : vector<1x12xf32> to vector<1x3xf32>
    %94 = vector.extract_strided_slice %89 {offsets = [0, 9], sizes = [1, 3], strides = [1, 1]} : vector<1x12xf32> to vector<1x3xf32>
    %95 = arith.mulf %92, %69 : vector<1x3xf32>
    %96 = arith.mulf %91, %93 : vector<1x3xf32>
    %97 = arith.addf %95, %96 : vector<1x3xf32>
    %98 = math.tanh %97 : vector<1x3xf32>
    %99 = arith.mulf %94, %98 : vector<1x3xf32>
    %100 = vector.extract_strided_slice %13 {offsets = [3, 0], sizes = [1, 12], strides = [1, 1]} : vector<8x12xf32> to vector<1x12xf32>
    %101 = vector.extract_strided_slice %99 {offsets = [0, 0], sizes = [1, 1], strides = [1, 1]} : vector<1x3xf32> to vector<1x1xf32>
    %102 = vector.broadcast %101 : vector<1x1xf32> to vector<1x12xf32>
    %103 = arith.mulf %102, %3 : vector<1x12xf32>
    %104 = arith.addf %100, %103 : vector<1x12xf32>
    %105 = vector.extract_strided_slice %99 {offsets = [0, 1], sizes = [1, 1], strides = [1, 1]} : vector<1x3xf32> to vector<1x1xf32>
    %106 = vector.broadcast %105 : vector<1x1xf32> to vector<1x12xf32>
    %107 = arith.mulf %106, %4 : vector<1x12xf32>
    %108 = arith.addf %104, %107 : vector<1x12xf32>
    %109 = vector.extract_strided_slice %99 {offsets = [0, 2], sizes = [1, 1], strides = [1, 1]} : vector<1x3xf32> to vector<1x1xf32>
    %110 = vector.broadcast %109 : vector<1x1xf32> to vector<1x12xf32>
    %111 = arith.mulf %110, %5 : vector<1x12xf32>
    %112 = arith.addf %108, %111 : vector<1x12xf32>
    %113 = arith.negf %112 : vector<1x12xf32>
    %114 = math.exp %113 : vector<1x12xf32>
    %cst_7 = arith.constant 1.000000e+00 : f32
    %115 = vector.broadcast %cst_7 : f32 to vector<1x12xf32>
    %116 = arith.addf %115, %114 : vector<1x12xf32>
    %117 = arith.divf %115, %116 : vector<1x12xf32>
    %118 = math.tanh %112 : vector<1x12xf32>
    %119 = vector.extract_strided_slice %117 {offsets = [0, 0], sizes = [1, 3], strides = [1, 1]} : vector<1x12xf32> to vector<1x3xf32>
    %120 = vector.extract_strided_slice %117 {offsets = [0, 3], sizes = [1, 3], strides = [1, 1]} : vector<1x12xf32> to vector<1x3xf32>
    %121 = vector.extract_strided_slice %118 {offsets = [0, 6], sizes = [1, 3], strides = [1, 1]} : vector<1x12xf32> to vector<1x3xf32>
    %122 = vector.extract_strided_slice %117 {offsets = [0, 9], sizes = [1, 3], strides = [1, 1]} : vector<1x12xf32> to vector<1x3xf32>
    %123 = arith.mulf %120, %97 : vector<1x3xf32>
    %124 = arith.mulf %119, %121 : vector<1x3xf32>
    %125 = arith.addf %123, %124 : vector<1x3xf32>
    %126 = math.tanh %125 : vector<1x3xf32>
    %127 = arith.mulf %122, %126 : vector<1x3xf32>
    %128 = vector.extract_strided_slice %13 {offsets = [4, 0], sizes = [1, 12], strides = [1, 1]} : vector<8x12xf32> to vector<1x12xf32>
    %129 = vector.extract_strided_slice %127 {offsets = [0, 0], sizes = [1, 1], strides = [1, 1]} : vector<1x3xf32> to vector<1x1xf32>
    %130 = vector.broadcast %129 : vector<1x1xf32> to vector<1x12xf32>
    %131 = arith.mulf %130, %3 : vector<1x12xf32>
    %132 = arith.addf %128, %131 : vector<1x12xf32>
    %133 = vector.extract_strided_slice %127 {offsets = [0, 1], sizes = [1, 1], strides = [1, 1]} : vector<1x3xf32> to vector<1x1xf32>
    %134 = vector.broadcast %133 : vector<1x1xf32> to vector<1x12xf32>
    %135 = arith.mulf %134, %4 : vector<1x12xf32>
    %136 = arith.addf %132, %135 : vector<1x12xf32>
    %137 = vector.extract_strided_slice %127 {offsets = [0, 2], sizes = [1, 1], strides = [1, 1]} : vector<1x3xf32> to vector<1x1xf32>
    %138 = vector.broadcast %137 : vector<1x1xf32> to vector<1x12xf32>
    %139 = arith.mulf %138, %5 : vector<1x12xf32>
    %140 = arith.addf %136, %139 : vector<1x12xf32>
    %141 = arith.negf %140 : vector<1x12xf32>
    %142 = math.exp %141 : vector<1x12xf32>
    %cst_8 = arith.constant 1.000000e+00 : f32
    %143 = vector.broadcast %cst_8 : f32 to vector<1x12xf32>
    %144 = arith.addf %143, %142 : vector<1x12xf32>
    %145 = arith.divf %143, %144 : vector<1x12xf32>
    %146 = math.tanh %140 : vector<1x12xf32>
    %147 = vector.extract_strided_slice %145 {offsets = [0, 0], sizes = [1, 3], strides = [1, 1]} : vector<1x12xf32> to vector<1x3xf32>
    %148 = vector.extract_strided_slice %145 {offsets = [0, 3], sizes = [1, 3], strides = [1, 1]} : vector<1x12xf32> to vector<1x3xf32>
    %149 = vector.extract_strided_slice %146 {offsets = [0, 6], sizes = [1, 3], strides = [1, 1]} : vector<1x12xf32> to vector<1x3xf32>
    %150 = vector.extract_strided_slice %145 {offsets = [0, 9], sizes = [1, 3], strides = [1, 1]} : vector<1x12xf32> to vector<1x3xf32>
    %151 = arith.mulf %148, %125 : vector<1x3xf32>
    %152 = arith.mulf %147, %149 : vector<1x3xf32>
    %153 = arith.addf %151, %152 : vector<1x3xf32>
    %154 = math.tanh %153 : vector<1x3xf32>
    %155 = arith.mulf %150, %154 : vector<1x3xf32>
    %156 = vector.extract_strided_slice %13 {offsets = [5, 0], sizes = [1, 12], strides = [1, 1]} : vector<8x12xf32> to vector<1x12xf32>
    %157 = vector.extract_strided_slice %155 {offsets = [0, 0], sizes = [1, 1], strides = [1, 1]} : vector<1x3xf32> to vector<1x1xf32>
    %158 = vector.broadcast %157 : vector<1x1xf32> to vector<1x12xf32>
    %159 = arith.mulf %158, %3 : vector<1x12xf32>
    %160 = arith.addf %156, %159 : vector<1x12xf32>
    %161 = vector.extract_strided_slice %155 {offsets = [0, 1], sizes = [1, 1], strides = [1, 1]} : vector<1x3xf32> to vector<1x1xf32>
    %162 = vector.broadcast %161 : vector<1x1xf32> to vector<1x12xf32>
    %163 = arith.mulf %162, %4 : vector<1x12xf32>
    %164 = arith.addf %160, %163 : vector<1x12xf32>
    %165 = vector.extract_strided_slice %155 {offsets = [0, 2], sizes = [1, 1], strides = [1, 1]} : vector<1x3xf32> to vector<1x1xf32>
    %166 = vector.broadcast %165 : vector<1x1xf32> to vector<1x12xf32>
    %167 = arith.mulf %166, %5 : vector<1x12xf32>
    %168 = arith.addf %164, %167 : vector<1x12xf32>
    %169 = arith.negf %168 : vector<1x12xf32>
    %170 = math.exp %169 : vector<1x12xf32>
    %cst_9 = arith.constant 1.000000e+00 : f32
    %171 = vector.broadcast %cst_9 : f32 to vector<1x12xf32>
    %172 = arith.addf %171, %170 : vector<1x12xf32>
    %173 = arith.divf %171, %172 : vector<1x12xf32>
    %174 = math.tanh %168 : vector<1x12xf32>
    %175 = vector.extract_strided_slice %173 {offsets = [0, 0], sizes = [1, 3], strides = [1, 1]} : vector<1x12xf32> to vector<1x3xf32>
    %176 = vector.extract_strided_slice %173 {offsets = [0, 3], sizes = [1, 3], strides = [1, 1]} : vector<1x12xf32> to vector<1x3xf32>
    %177 = vector.extract_strided_slice %174 {offsets = [0, 6], sizes = [1, 3], strides = [1, 1]} : vector<1x12xf32> to vector<1x3xf32>
    %178 = vector.extract_strided_slice %173 {offsets = [0, 9], sizes = [1, 3], strides = [1, 1]} : vector<1x12xf32> to vector<1x3xf32>
    %179 = arith.mulf %176, %153 : vector<1x3xf32>
    %180 = arith.mulf %175, %177 : vector<1x3xf32>
    %181 = arith.addf %179, %180 : vector<1x3xf32>
    %182 = math.tanh %181 : vector<1x3xf32>
    %183 = arith.mulf %178, %182 : vector<1x3xf32>
    %184 = vector.extract_strided_slice %13 {offsets = [6, 0], sizes = [1, 12], strides = [1, 1]} : vector<8x12xf32> to vector<1x12xf32>
    %185 = vector.extract_strided_slice %183 {offsets = [0, 0], sizes = [1, 1], strides = [1, 1]} : vector<1x3xf32> to vector<1x1xf32>
    %186 = vector.broadcast %185 : vector<1x1xf32> to vector<1x12xf32>
    %187 = arith.mulf %186, %3 : vector<1x12xf32>
    %188 = arith.addf %184, %187 : vector<1x12xf32>
    %189 = vector.extract_strided_slice %183 {offsets = [0, 1], sizes = [1, 1], strides = [1, 1]} : vector<1x3xf32> to vector<1x1xf32>
    %190 = vector.broadcast %189 : vector<1x1xf32> to vector<1x12xf32>
    %191 = arith.mulf %190, %4 : vector<1x12xf32>
    %192 = arith.addf %188, %191 : vector<1x12xf32>
    %193 = vector.extract_strided_slice %183 {offsets = [0, 2], sizes = [1, 1], strides = [1, 1]} : vector<1x3xf32> to vector<1x1xf32>
    %194 = vector.broadcast %193 : vector<1x1xf32> to vector<1x12xf32>
    %195 = arith.mulf %194, %5 : vector<1x12xf32>
    %196 = arith.addf %192, %195 : vector<1x12xf32>
    %197 = arith.negf %196 : vector<1x12xf32>
    %198 = math.exp %197 : vector<1x12xf32>
    %cst_10 = arith.constant 1.000000e+00 : f32
    %199 = vector.broadcast %cst_10 : f32 to vector<1x12xf32>
    %200 = arith.addf %199, %198 : vector<1x12xf32>
    %201 = arith.divf %199, %200 : vector<1x12xf32>
    %202 = math.tanh %196 : vector<1x12xf32>
    %203 = vector.extract_strided_slice %201 {offsets = [0, 0], sizes = [1, 3], strides = [1, 1]} : vector<1x12xf32> to vector<1x3xf32>
    %204 = vector.extract_strided_slice %201 {offsets = [0, 3], sizes = [1, 3], strides = [1, 1]} : vector<1x12xf32> to vector<1x3xf32>
    %205 = vector.extract_strided_slice %202 {offsets = [0, 6], sizes = [1, 3], strides = [1, 1]} : vector<1x12xf32> to vector<1x3xf32>
    %206 = vector.extract_strided_slice %201 {offsets = [0, 9], sizes = [1, 3], strides = [1, 1]} : vector<1x12xf32> to vector<1x3xf32>
    %207 = arith.mulf %204, %181 : vector<1x3xf32>
    %208 = arith.mulf %203, %205 : vector<1x3xf32>
    %209 = arith.addf %207, %208 : vector<1x3xf32>
    %210 = math.tanh %209 : vector<1x3xf32>
    %211 = arith.mulf %206, %210 : vector<1x3xf32>
    %212 = vector.extract_strided_slice %13 {offsets = [7, 0], sizes = [1, 12], strides = [1, 1]} : vector<8x12xf32> to vector<1x12xf32>
    %213 = vector.extract_strided_slice %211 {offsets = [0, 0], sizes = [1, 1], strides = [1, 1]} : vector<1x3xf32> to vector<1x1xf32>
    %214 = vector.broadcast %213 : vector<1x1xf32> to vector<1x12xf32>
    %215 = arith.mulf %214, %3 : vector<1x12xf32>
    %216 = arith.addf %212, %215 : vector<1x12xf32>
    %217 = vector.extract_strided_slice %211 {offsets = [0, 1], sizes = [1, 1], strides = [1, 1]} : vector<1x3xf32> to vector<1x1xf32>
    %218 = vector.broadcast %217 : vector<1x1xf32> to vector<1x12xf32>
    %219 = arith.mulf %218, %4 : vector<1x12xf32>
    %220 = arith.addf %216, %219 : vector<1x12xf32>
    %221 = vector.extract_strided_slice %211 {offsets = [0, 2], sizes = [1, 1], strides = [1, 1]} : vector<1x3xf32> to vector<1x1xf32>
    %222 = vector.broadcast %221 : vector<1x1xf32> to vector<1x12xf32>
    %223 = arith.mulf %222, %5 : vector<1x12xf32>
    %224 = arith.addf %220, %223 : vector<1x12xf32>
    %225 = arith.negf %224 : vector<1x12xf32>
    %226 = math.exp %225 : vector<1x12xf32>
    %cst_11 = arith.constant 1.000000e+00 : f32
    %227 = vector.broadcast %cst_11 : f32 to vector<1x12xf32>
    %228 = arith.addf %227, %226 : vector<1x12xf32>
    %229 = arith.divf %227, %228 : vector<1x12xf32>
    %230 = math.tanh %224 : vector<1x12xf32>
    %231 = vector.extract_strided_slice %229 {offsets = [0, 0], sizes = [1, 3], strides = [1, 1]} : vector<1x12xf32> to vector<1x3xf32>
    %232 = vector.extract_strided_slice %229 {offsets = [0, 3], sizes = [1, 3], strides = [1, 1]} : vector<1x12xf32> to vector<1x3xf32>
    %233 = vector.extract_strided_slice %230 {offsets = [0, 6], sizes = [1, 3], strides = [1, 1]} : vector<1x12xf32> to vector<1x3xf32>
    %234 = vector.extract_strided_slice %229 {offsets = [0, 9], sizes = [1, 3], strides = [1, 1]} : vector<1x12xf32> to vector<1x3xf32>
    %235 = arith.mulf %232, %209 : vector<1x3xf32>
    %236 = arith.mulf %231, %233 : vector<1x3xf32>
    %237 = arith.addf %235, %236 : vector<1x3xf32>
    %238 = math.tanh %237 : vector<1x3xf32>
    %239 = arith.mulf %234, %238 : vector<1x3xf32>
    %240 = tpu.concatenate %43, %71, %99, %127, %155, %183, %211, %239 in 0 : vector<1x3xf32>, vector<1x3xf32>, vector<1x3xf32>, vector<1x3xf32>, vector<1x3xf32>, vector<1x3xf32>, vector<1x3xf32>, vector<1x3xf32> -> vector<8x3xf32>
    %241 = vector.broadcast %6 : vector<1x3xf32> to vector<8x3xf32>
    %242 = arith.mulf %240, %241 : vector<8x3xf32>
    %cst_12 = arith.constant dense<0.000000e+00> : vector<8xf32>
    %243 = vector.multi_reduction <add>, %242, %cst_12 [1] : vector<8x3xf32> to vector<8xf32>
    %244 = vector.shape_cast %243 : vector<8xf32> to vector<8x1xf32>
    %245 = vector.broadcast %7 : vector<1x1xf32> to vector<8x1xf32>
    %246 = arith.addf %244, %245 : vector<8x1xf32>
    %c0_13 = arith.constant 0 : index
    %c0_14 = arith.constant 0 : index
    %247 = vector.load %arg2[%c0_13, %c0_14] : memref<8x1xf32, #tpu.memory_space<vmem>>, vector<8x1xf32>
    tpu.vector_store %arg2[%c0_13, %c0_14], %246 {strides = array<i32>} : memref<8x1xf32, #tpu.memory_space<vmem>>, vector<8x1xf32>,
    return
  }
}

</mosaic_0001>

<llo_original>
// kernel: lstm_forward_pallas.1
$region0: #{lstm_forward_pallas.1}
  #allocation0 [shape = 'u32[]', space=smem, size = 0x4, offset = 0x4, fixed_abs, tag = 'smem constant byte address 0x4 - core index']
  #allocation1 [shape = 'u32[144,128]{1,0:T(1,128)}', space=vmem, size = 0x12000, scoped, tag = 'internal scratch']
  %s0 = inlined_call_operand.vmem [shape: f32[8,1], index: 0, kind: input, shape index: {}]
  %s1 = inlined_call_operand.vmem [shape: f32[8,12], index: 1, kind: input, shape index: {}]
  %s2 = inlined_call_operand.vmem [shape: f32[8,1], index: 2, kind: output, shape index: {}]
  %s3 = sld [smem:[#allocation0]]
  $region18: #{lstm_forward_pallas.1} parent=0
    _
  %s5 = ssub.s32 1, %s3
  %s6 = scalar_select 0, %s5, %s3
  // Predicated region
  $region2: #{lstm_forward_pallas.1} parent=0 // pred_check
    _
  $region3: #{lstm_forward_pallas.1} parent=0 // pred_check_branch
    %8 = sbr.rel (0) target = $region5
  $region4: #{lstm_forward_pallas.1} parent=0 // pred_region
    _
  $region5: #{lstm_forward_pallas.1} parent=0 // pred_fallthru
    _
  // Predicated region
  $region6: #{lstm_forward_pallas.1} parent=0 // pred_check
    _
  $region7: #{lstm_forward_pallas.1} parent=0 // pred_check_branch
    %10 = sbr.rel (0) target = $region9
  $region8: #{lstm_forward_pallas.1} parent=0 // pred_region
    _
  $region9: #{lstm_forward_pallas.1} parent=0 // pred_fallthru
    _
  %v11 = vld [vmem:[%s1] sm:$0xff]
  %v12 = vld [vmem:[%s0] sm:$0xff]
  %14 = vset.pattern.permute.xlu0 0
  %15 = vperm.xlu0 %14, %v12
  %v16 = vpop.permute.xlu0 %15
  %v18 = vlaneseq
  %v19 = vshrl.u32 %v18, 7
  %v20 = vsub.s32 0, %v19
  %v21 = vrot.slane %v11, %v20
  %v22 = vmul.f32 %v16, %v21
  %v23 = vlaneseq
  %v24 = vshrl.u32 %v23, 7
  %v25 = vsub.s32 1, %v24
  %v26 = vrot.slane %v11, %v25
  %v27 = vadd.f32 %v22, %v26
  %v28 = vmul.f32 %v11, 0.0
  %v30 = vrot.slane %v28, 2
  %v32 = vadd.f32 %v27, %v30
  %v33 = vrot.slane %v28, 3
  %v35 = vadd.f32 %v32, %v33
  %v36 = vrot.slane %v28, 4
  %v38 = vadd.f32 %v35, %v36
  %v39 = vxor.u32 %v38, 2147483648
  %v40 = vmul.f32 %v39, 1.442695
  %v41 = vpow.pop %v40
  %v42 = vadd.f32 %v41, 1.0
  %v43 = vrcp.pop %v42
  %v44 = vmul.f32 1.0, %v43
  %v45 = vtanh.pop %v38
  %v46 = vmul.f32 %v44, 0.0
  %48 = vrot.lane.b32.xlu0 %v45, 122
  %v49 = vpop.permute.xlu0 %48
  %v51 = vmul.f32 %v44, %v49
  %53 = vrot.lane.b32.xlu0 %v51, 3
  %v54 = vpop.permute.xlu0 %53
  %v56 = vadd.f32 %v46, %v54
  %v57 = vtanh.pop %v56
  %59 = vrot.lane.b32.xlu0 %v57, 6
  %v60 = vpop.permute.xlu0 %59
  %v62 = vmul.f32 %v44, %v60
  %64 = vset.pattern.permute.xlu0 9
  %65 = vperm.xlu0 %64, %v62
  %v66 = vpop.permute.xlu0 %65
  %v69 = vrot.slane %v11, 2
  %v71 = vmul.f32 %v66, %v69
  %v73 = vrot.slane %v71, 7
  %v75 = vadd.f32 %v27, %v73
  %76 = vset.pattern.permute.xlu0 10
  %77 = vperm.xlu0 %76, %v62
  %v78 = vpop.permute.xlu0 %77
  %v80 = vrot.slane %v11, 3
  %v82 = vmul.f32 %v78, %v80
  %v84 = vrot.slane %v82, 7
  %v86 = vadd.f32 %v75, %v84
  %87 = vset.pattern.permute.xlu0 11
  %88 = vperm.xlu0 %87, %v62
  %v89 = vpop.permute.xlu0 %88
  %v91 = vrot.slane %v11, 4
  %v93 = vmul.f32 %v89, %v91
  %v95 = vrot.slane %v93, 7
  %v97 = vadd.f32 %v86, %v95
  %v98 = vxor.u32 %v97, 2147483648
  %v99 = vmul.f32 %v98, 1.442695
  %v100 = vpow.pop %v99
  %v101 = vadd.f32 %v100, 1.0
  %v102 = vrcp.pop %v101
  %v103 = vmul.f32 1.0, %v102
  %v104 = vtanh.pop %v97
  %v106 = vrot.slane %v56, 7
  %v108 = vmul.f32 %v103, %v106
  %110 = vrot.lane.b32.xlu0 %v104, 122
  %v111 = vpop.permute.xlu0 %110
  %v113 = vmul.f32 %v103, %v111
  %115 = vrot.lane.b32.xlu0 %v113, 3
  %v116 = vpop.permute.xlu0 %115
  %v118 = vadd.f32 %v108, %v116
  %v119 = vtanh.pop %v118
  %121 = vrot.lane.b32.xlu0 %v119, 6
  %v122 = vpop.permute.xlu0 %121
  %v124 = vmul.f32 %v103, %v122
  %126 = vset.pattern.permute.xlu0 9
  %127 = vperm.xlu0 %126, %v124
  %v128 = vpop.permute.xlu0 %127
  %v130 = vrot.slane %v11, 1
  %v132 = vmul.f32 %v128, %v130
  %v134 = vrot.slane %v132, 7
  %v136 = vadd.f32 %v27, %v134
  %137 = vset.pattern.permute.xlu0 10
  %138 = vperm.xlu0 %137, %v124
  %v139 = vpop.permute.xlu0 %138
  %v141 = vmul.f32 %v139, %v69
  %v143 = vrot.slane %v141, 7
  %v145 = vadd.f32 %v136, %v143
  %146 = vset.pattern.permute.xlu0 11
  %147 = vperm.xlu0 %146, %v124
  %v148 = vpop.permute.xlu0 %147
  %v150 = vmul.f32 %v148, %v80
  %v152 = vrot.slane %v150, 7
  %v154 = vadd.f32 %v145, %v152
  %v155 = vxor.u32 %v154, 2147483648
  %v156 = vmul.f32 %v155, 1.442695
  %v157 = vpow.pop %v156
  %v158 = vadd.f32 %v157, 1.0
  %v159 = vrcp.pop %v158
  %v160 = vmul.f32 1.0, %v159
  %v161 = vtanh.pop %v154
  %v163 = vrot.slane %v118, 7
  %v165 = vmul.f32 %v160, %v163
  %167 = vrot.lane.b32.xlu0 %v161, 122
  %v168 = vpop.permute.xlu0 %167
  %v170 = vmul.f32 %v160, %v168
  %172 = vrot.lane.b32.xlu0 %v170, 3
  %v173 = vpop.permute.xlu0 %172
  %v175 = vadd.f32 %v165, %v173
  %v176 = vtanh.pop %v175
  %178 = vrot.lane.b32.xlu0 %v176, 6
  %v179 = vpop.permute.xlu0 %178
  %v181 = vmul.f32 %v160, %v179
  %183 = vset.pattern.permute.xlu0 9
  %184 = vperm.xlu0 %183, %v181
  %v185 = vpop.permute.xlu0 %184
  %v187 = vmul.f32 %v185, %v11
  %v189 = vrot.slane %v187, 7
  %v191 = vadd.f32 %v27, %v189
  %192 = vset.pattern.permute.xlu0 10
  %193 = vperm.xlu0 %192, %v181
  %v194 = vpop.permute.xlu0 %193
  %v196 = vmul.f32 %v194, %v130
  %v198 = vrot.slane %v196, 7
  %v200 = vadd.f32 %v191, %v198
  %201 = vset.pattern.permute.xlu0 11
  %202 = vperm.xlu0 %201, %v181
  %v203 = vpop.permute.xlu0 %202
  %v205 = vmul.f32 %v203, %v69
  %v207 = vrot.slane %v205, 7
  %v209 = vadd.f32 %v200, %v207
  %v210 = vxor.u32 %v209, 2147483648
  %v211 = vmul.f32 %v210, 1.442695
  %v212 = vpow.pop %v211
  %v213 = vadd.f32 %v212, 1.0
  %v214 = vrcp.pop %v213
  %v215 = vmul.f32 1.0, %v214
  %v216 = vtanh.pop %v209
  %v218 = vrot.slane %v175, 7
  %v220 = vmul.f32 %v215, %v218
  %222 = vrot.lane.b32.xlu0 %v216, 122
  %v223 = vpop.permute.xlu0 %222
  %v225 = vmul.f32 %v215, %v223
  %227 = vrot.lane.b32.xlu0 %v225, 3
  %v228 = vpop.permute.xlu0 %227
  %v230 = vadd.f32 %v220, %v228
  %v231 = vtanh.pop %v230
  %233 = vrot.lane.b32.xlu0 %v231, 6
  %v234 = vpop.permute.xlu0 %233
  %v236 = vmul.f32 %v215, %v234
  %238 = vset.pattern.permute.xlu0 9
  %239 = vperm.xlu0 %238, %v236
  %v240 = vpop.permute.xlu0 %239
  %v242 = vrot.slane %v11, 7
  %v244 = vmul.f32 %v240, %v242
  %v246 = vrot.slane %v244, 7
  %v248 = vadd.f32 %v27, %v246
  %249 = vset.pattern.permute.xlu0 10
  %250 = vperm.xlu0 %249, %v236
  %v251 = vpop.permute.xlu0 %250
  %v253 = vmul.f32 %v251, %v11
  %v255 = vrot.slane %v253, 7
  %v257 = vadd.f32 %v248, %v255
  %258 = vset.pattern.permute.xlu0 11
  %259 = vperm.xlu0 %258, %v236
  %v260 = vpop.permute.xlu0 %259
  %v262 = vmul.f32 %v260, %v130
  %v264 = vrot.slane %v262, 7
  %v266 = vadd.f32 %v257, %v264
  %v267 = vxor.u32 %v266, 2147483648
  %v268 = vmul.f32 %v267, 1.442695
  %v269 = vpow.pop %v268
  %v270 = vadd.f32 %v269, 1.0
  %v271 = vrcp.pop %v270
  %v272 = vmul.f32 1.0, %v271
  %v273 = vtanh.pop %v266
  %v275 = vrot.slane %v230, 7
  %v277 = vmul.f32 %v272, %v275
  %279 = vrot.lane.b32.xlu0 %v273, 122
  %v280 = vpop.permute.xlu0 %279
  %v282 = vmul.f32 %v272, %v280
  %284 = vrot.lane.b32.xlu0 %v282, 3
  %v285 = vpop.permute.xlu0 %284
  %v287 = vadd.f32 %v277, %v285
  %v288 = vtanh.pop %v287
  %290 = vrot.lane.b32.xlu0 %v288, 6
  %v291 = vpop.permute.xlu0 %290
  %v293 = vmul.f32 %v272, %v291
  %295 = vset.pattern.permute.xlu0 9
  %296 = vperm.xlu0 %295, %v293
  %v297 = vpop.permute.xlu0 %296
  %v299 = vrot.slane %v11, 6
  %v301 = vmul.f32 %v297, %v299
  %v303 = vrot.slane %v301, 7
  %v305 = vadd.f32 %v27, %v303
  %306 = vset.pattern.permute.xlu0 10
  %307 = vperm.xlu0 %306, %v293
  %v308 = vpop.permute.xlu0 %307
  %v310 = vmul.f32 %v308, %v242
  %v312 = vrot.slane %v310, 7
  %v314 = vadd.f32 %v305, %v312
  %315 = vset.pattern.permute.xlu0 11
  %316 = vperm.xlu0 %315, %v293
  %v317 = vpop.permute.xlu0 %316
  %v319 = vmul.f32 %v317, %v11
  %v321 = vrot.slane %v319, 7
  %v323 = vadd.f32 %v314, %v321
  %v324 = vxor.u32 %v323, 2147483648
  %v325 = vmul.f32 %v324, 1.442695
  %v326 = vpow.pop %v325
  %v327 = vadd.f32 %v326, 1.0
  %v328 = vrcp.pop %v327
  %v329 = vmul.f32 1.0, %v328
  %v330 = vtanh.pop %v323
  %v332 = vrot.slane %v287, 7
  %v334 = vmul.f32 %v329, %v332
  %336 = vrot.lane.b32.xlu0 %v330, 122
  %v337 = vpop.permute.xlu0 %336
  %v339 = vmul.f32 %v329, %v337
  %341 = vrot.lane.b32.xlu0 %v339, 3
  %v342 = vpop.permute.xlu0 %341
  %v344 = vadd.f32 %v334, %v342
  %v345 = vtanh.pop %v344
  %347 = vrot.lane.b32.xlu0 %v345, 6
  %v348 = vpop.permute.xlu0 %347
  %v350 = vmul.f32 %v329, %v348
  %352 = vset.pattern.permute.xlu0 9
  %353 = vperm.xlu0 %352, %v350
  %v354 = vpop.permute.xlu0 %353
  %v356 = vrot.slane %v11, 5
  %v358 = vmul.f32 %v354, %v356
  %v360 = vrot.slane %v358, 7
  %v362 = vadd.f32 %v27, %v360
  %363 = vset.pattern.permute.xlu0 10
  %364 = vperm.xlu0 %363, %v350
  %v365 = vpop.permute.xlu0 %364
  %v367 = vmul.f32 %v365, %v299
  %v369 = vrot.slane %v367, 7
  %v371 = vadd.f32 %v362, %v369
  %372 = vset.pattern.permute.xlu0 11
  %373 = vperm.xlu0 %372, %v350
  %v374 = vpop.permute.xlu0 %373
  %v376 = vmul.f32 %v374, %v242
  %v378 = vrot.slane %v376, 7
  %v380 = vadd.f32 %v371, %v378
  %v381 = vxor.u32 %v380, 2147483648
  %v382 = vmul.f32 %v381, 1.442695
  %v383 = vpow.pop %v382
  %v384 = vadd.f32 %v383, 1.0
  %v385 = vrcp.pop %v384
  %v386 = vmul.f32 1.0, %v385
  %v387 = vtanh.pop %v380
  %v389 = vrot.slane %v344, 7
  %v391 = vmul.f32 %v386, %v389
  %393 = vrot.lane.b32.xlu0 %v387, 122
  %v394 = vpop.permute.xlu0 %393
  %v396 = vmul.f32 %v386, %v394
  %398 = vrot.lane.b32.xlu0 %v396, 3
  %v399 = vpop.permute.xlu0 %398
  %v401 = vadd.f32 %v391, %v399
  %v402 = vtanh.pop %v401
  %404 = vrot.lane.b32.xlu0 %v402, 6
  %v405 = vpop.permute.xlu0 %404
  %v407 = vmul.f32 %v386, %v405
  %409 = vset.pattern.permute.xlu0 9
  %410 = vperm.xlu0 %409, %v407
  %v411 = vpop.permute.xlu0 %410
  %v413 = vmul.f32 %v411, %v91
  %v415 = vrot.slane %v413, 7
  %v417 = vadd.f32 %v27, %v415
  %418 = vset.pattern.permute.xlu0 10
  %419 = vperm.xlu0 %418, %v407
  %v420 = vpop.permute.xlu0 %419
  %v422 = vmul.f32 %v420, %v356
  %v424 = vrot.slane %v422, 7
  %v426 = vadd.f32 %v417, %v424
  %427 = vset.pattern.permute.xlu0 11
  %428 = vperm.xlu0 %427, %v407
  %v429 = vpop.permute.xlu0 %428
  %v431 = vmul.f32 %v429, %v299
  %v433 = vrot.slane %v431, 7
  %v435 = vadd.f32 %v426, %v433
  %v436 = vxor.u32 %v435, 2147483648
  %v437 = vmul.f32 %v436, 1.442695
  %v438 = vpow.pop %v437
  %v439 = vadd.f32 %v438, 1.0
  %v440 = vrcp.pop %v439
  %v441 = vmul.f32 1.0, %v440
  %v442 = vtanh.pop %v435
  %v444 = vrot.slane %v401, 7
  %v446 = vmul.f32 %v441, %v444
  %448 = vrot.lane.b32.xlu0 %v442, 122
  %v449 = vpop.permute.xlu0 %448
  %v451 = vmul.f32 %v441, %v449
  %453 = vrot.lane.b32.xlu0 %v451, 3
  %v454 = vpop.permute.xlu0 %453
  %v456 = vadd.f32 %v446, %v454
  %v457 = vtanh.pop %v456
  %459 = vrot.lane.b32.xlu0 %v457, 6
  %v460 = vpop.permute.xlu0 %459
  %v462 = vmul.f32 %v441, %v460
  %vm463 = vcmask 1040384
  %v464 = vsel %vm463, %v62, %v124
  %vm465 = vcmask 1041408
  %v466 = vsel %vm465, %v464, %v181
  %vm467 = vcmask 1042432
  %v468 = vsel %vm467, %v466, %v236
  %vm469 = vcmask 1043456
  %v470 = vsel %vm469, %v468, %v293
  %vm471 = vcmask 1044480
  %v472 = vsel %vm471, %v470, %v350
  %vm473 = vcmask 1045504
  %v474 = vsel %vm473, %v472, %v407
  %vm475 = vcmask 1046528
  %v476 = vsel %vm475, %v474, %v462
  %v477 = vlaneseq
  %v478 = vshrl.u32 %v477, 7
  %v479 = vsub.s32 5, %v478
  %v480 = vrot.slane %v11, %v479
  %482 = vrot.lane.b32.xlu0 %v480, 9
  %v483 = vpop.permute.xlu0 %482
  %v485 = vmul.f32 %v476, %v483
  %487 = vrot.lane.b32.xlu0 %v485, 119
  %v488 = vpop.permute.xlu0 %487
  %vm490 = vcmask 23552
  %v491 = vsel %vm490, %v488, 0.0
  %492 = vadd.xlane.f32.xlu0 %v491
  %v493 = vpop.xlane.xlu0 %492
  %v494 = vadd.f32 %v493, %v480
  %496 = vrot.lane.b32.xlu0 %v494, 125
  %v497 = vpop.permute.xlu0 %496
  %vm499 = vcmask 7168
  %500 = vst.msk [vmem:[%s2] sm:$0xff] %vm499, %v497
  // Predicated region
  $region10: #{lstm_forward_pallas.1} parent=0 // pred_check
    _
  $region11: #{lstm_forward_pallas.1} parent=0 // pred_check_branch
    %502 = sbr.rel (0) target = $region13
  $region12: #{lstm_forward_pallas.1} parent=0 // pred_region
    _
  $region13: #{lstm_forward_pallas.1} parent=0 // pred_fallthru
    _
  // Predicated region
  $region14: #{lstm_forward_pallas.1} parent=0 // pred_check
    _
  $region15: #{lstm_forward_pallas.1} parent=0 // pred_check_branch
    %504 = sbr.rel (0) target = $region17
  $region16: #{lstm_forward_pallas.1} parent=0 // pred_region
    _
  $region17: #{lstm_forward_pallas.1} parent=0 // pred_fallthru
    _

</llo_original>
